<compile_context>
chip_gen: v5e
topology: v5e:2x2
jax: 0.10.0
libtpu: 0.0.40
codegen_flags: <defaults>
</compile_context>

<pallas_src>
import math
import functools
from typing import NamedTuple

import jax
import jax.numpy as jnp
from jax.experimental import pallas as pl
from jax.experimental.pallas import tpu as pltpu


def _round_up(v: int, m: int) -> int:
    return ((v + m - 1) // m) * m


def _vmem_cap_bytes() -> int:
    """Generation-aware VMEM request cap (never ask for all of physical VMEM)."""
    try:
        info = pltpu.get_tpu_info()
        cap = getattr(info, "vmem_capacity_bytes", None)
        if cap:
            return int(0.75 * int(cap))   # ~96 MiB v5e/v6e, ~48 MiB v7x
    except Exception:
        pass
    return 48 << 20  # conservative fallback, safe on all generations


class Plan(NamedTuple):
    tm: int
    tn: int
    tk: int
    batch_p: int
    fin_p: int
    fout_p: int
    out_features: int
    fout_outer: bool
    vmem_bytes: int


def make_plan(batch, in_features, out_features, dtype, *, tm=512, tn=512) -> Plan:
    """Static tiling / grid-order / VMEM plan (pure Python, trace-time only)."""
    isz = jnp.dtype(dtype).itemsize
    cap = _vmem_cap_bytes()

    # M (batch) tile: multiple of 8 that divides the 8-padded batch (no waste rows).
    batch_p = _round_up(batch, 8)
    tm_eff = min(tm, batch_p)
    while batch_p % tm_eff:
        tm_eff -= 8

    # N (out_features) tile: multiple of 128 that divides the 128-padded width.
    fout_p = _round_up(out_features, 128)
    tn_eff = min(tn, fout_p)
    while fout_p % tn_eff:
        tn_eff -= 128

    # Guarantee >=2 steps along a parallel axis so both v7x TensorCores get work.
    if batch_p // tm_eff == 1 and fout_p // tn_eff == 1:
        if batch_p >= 16 and batch_p % 16 == 0:
            tm_eff = batch_p // 2
        elif fout_p >= 256 and fout_p % 256 == 0:
            tn_eff = fout_p // 2

    # K tile: keep the whole contraction per tile when it fits comfortably in
    # VMEM (single k step -> weights or x stay resident), else tile K at 512.
    fin_p = _round_up(in_features, 128)
    tk_eff = fin_p
    k_block_bytes = 2 * (tm_eff * tk_eff + 2 * tk_eff * tn_eff) * isz  # dbl-buffered
    if k_block_bytes > cap // 2:
        tk_eff = 512
        fin_p = _round_up(in_features, tk_eff)

    n_batch = batch_p // tm_eff
    n_fout = fout_p // tn_eff

    # Grid order: make the operand with the larger redundant HBM re-read cost
    # the resident one (outer axis sweeps it exactly once).
    x_bytes = batch_p * fin_p * isz
    w_bytes = 2 * fin_p * fout_p * isz
    fout_outer = w_bytes * (n_batch - 1) > x_bytes * (n_fout - 1)

    # VMEM budget: double-buffered blocks + f32 accumulator + in-kernel temps.
    io_bytes = (tm_eff * tk_eff + 2 * tk_eff * tn_eff + tn_eff
                + tm_eff * tn_eff) * isz
    scratch_bytes = tm_eff * tn_eff * 4
    tmp_bytes = tm_eff * tk_eff * isz + 2 * tm_eff * tn_eff * 4
    vmem_bytes = int(min(max(2 * io_bytes + scratch_bytes + tmp_bytes + (4 << 20),
                             32 << 20), cap))

    return Plan(tm_eff, tn_eff, tk_eff, batch_p, fin_p, fout_p,
                int(out_features), bool(fout_outer), vmem_bytes)


def pack_params(w0, w1, bias, plan: Plan):
    """One-time weight packing (hoisted out of the per-call forward path):
    transpose to (in, out) layout and zero-pad to the plan's lane-dense shapes.
    Weights keep their own parameter dtype (no silent downcast)."""
    out_f, in_f = w0.shape

    def prep(w):
        wt = jnp.transpose(w)                                         # (in, out)
        return jnp.pad(wt, ((0, plan.fin_p - in_f), (0, plan.fout_p - out_f)))

    b_p = jnp.pad(bias.reshape(1, -1), ((0, 0), (0, plan.fout_p - out_f)))
    return prep(w0), prep(w1), b_p


def _custom_neuron_kernel(x_ref, w0_ref, w1_ref, b_ref, o_ref, acc_ref):
    """One (TM, TN) output tile, K-tiled:
       acc += (x*x) @ W0t_k + x @ W1t_k ; bias-add + cast + store at last k."""
    k = pl.program_id(2)

    @pl.when(k == 0)
    def _init():
        acc_ref[...] = jnp.zeros_like(acc_ref)

    x = x_ref[...]                                     # (TM, TK), native dtype
    acc_ref[...] += (
        jnp.dot(x * x, w0_ref[...], preferred_element_type=jnp.float32)
        + jnp.dot(x, w1_ref[...], preferred_element_type=jnp.float32))

    @pl.when(k == pl.num_programs(2) - 1)
    def _finalize():
        o_ref[...] = (acc_ref[...] + b_ref[...].astype(jnp.float32)).astype(o_ref.dtype)


@functools.partial(jax.jit, static_argnames=("plan",))
def custom_neuron_forward(x, w0t, w1t, b_p, plan: Plan):
    """x: (B, Fin); w0t/w1t: pre-packed (fin_p, fout_p); b_p: (1, fout_p)."""
    batch, in_features = x.shape
    dt = x.dtype
    tm, tn, tk = plan.tm, plan.tn, plan.tk
    n_batch = plan.batch_p // tm
    n_fout = plan.fout_p // tn
    n_k = plan.fin_p // tk

    # Lane-dense padding of the activation only (zero K columns contribute 0).
    x_p = jnp.pad(x, ((0, plan.batch_p - batch), (0, plan.fin_p - in_features)))

    if plan.fout_outer:
        # Weights swept once (outer); x streams along the inner batch axis.
        grid = (n_fout, n_batch, n_k)
        x_map = lambda j, i, k: (i, k)
        w_map = lambda j, i, k: (k, j)
        b_map = lambda j, i, k: (0, j)
        o_map = lambda j, i, k: (i, j)
    else:
        # x swept once (outer); weights stream along the inner fout axis.
        grid = (n_batch, n_fout, n_k)
        x_map = lambda i, j, k: (i, k)
        w_map = lambda i, j, k: (k, j)
        b_map = lambda i, j, k: (0, j)
        o_map = lambda i, j, k: (i, j)

    out_p = pl.pallas_call(
        _custom_neuron_kernel,
        out_shape=jax.ShapeDtypeStruct((plan.batch_p, plan.fout_p), dt),
        grid_spec=pltpu.PrefetchScalarGridSpec(
            num_scalar_prefetch=0,
            grid=grid,
            in_specs=[
                pl.BlockSpec((tm, tk), x_map),     # x tile
                pl.BlockSpec((tk, tn), w_map),     # W0.T tile
                pl.BlockSpec((tk, tn), w_map),     # W1.T tile
                pl.BlockSpec((1, tn), b_map),      # bias tile
            ],
            out_specs=pl.BlockSpec((tm, tn), o_map),
            scratch_shapes=[pltpu.VMEM((tm, tn), jnp.float32)],   # f32 accumulator
        ),
        compiler_params=pltpu.CompilerParams(
            dimension_semantics=("parallel", "parallel", "arbitrary"),
            vmem_limit_bytes=plan.vmem_bytes,
        ),
    )(x_p, w0t, w1t, b_p)

    return out_p[:batch, :plan.out_features]


def init_params(key, in_features, out_features, number=2, dtype=jnp.float32):
    """Matches the module's reset_parameters():
    kaiming_uniform_(a=sqrt(5)) on (out, in) -> U(-1/sqrt(fan_in), 1/sqrt(fan_in));
    bias -> U(-1/sqrt(fan_in), 1/sqrt(fan_in)), shape (out_features,)."""
    keys = jax.random.split(key, number + 1)
    bound = 1.0 / math.sqrt(in_features)
    weights = [
        jax.random.uniform(keys[i], (out_features, in_features), dtype,
                           minval=-bound, maxval=bound)
        for i in range(number)
    ]
    bias = jax.random.uniform(keys[number], (out_features,), dtype,
                              minval=-bound, maxval=bound)
    return weights, bias


if __name__ == "__main__":
    # TODO(synk): kernel is specialized to the 2-term expression "x**2 + x";
    # arbitrary symbolic_expression strings would need per-term transforms.
    key = jax.random.PRNGKey(0)
    k_x, k_p = jax.random.split(key)

    # Small shapes (deliberately non-multiples of 8/128 to exercise padding).
    batch = 16
    in_features = 48
    out_features = 80

    x = jax.random.normal(k_x, (batch, in_features), jnp.float32)
    (w0, w1), bias = init_params(k_p, in_features, out_features, number=2)

    plan = make_plan(batch, in_features, out_features, x.dtype)
    w0t, w1t, b_p = pack_params(w0, w1, bias, plan)       # one-time packing

    out = custom_neuron_forward(x, w0t, w1t, b_p, plan)
    out = jax.block_until_ready(out)

    # Pure-JAX reference of the module's forward ("x**2 + x"):
    ref = (jnp.dot(x * x, w0.T, precision=jax.lax.Precision.HIGHEST)
           + jnp.dot(x, w1.T, precision=jax.lax.Precision.HIGHEST)
           + bias[None, :])

    assert out.shape == (batch, out_features)
    assert jnp.allclose(out, ref, atol=1e-2, rtol=1e-2), "mismatch vs reference"

    print("KERNEL_OK")
</pallas_src>

<mosaic_0001>
module attributes {stable_mosaic.version = 11 : i64} {
  func.func @_custom_neuron_kernel(%arg0: i32, %arg1: i32, %arg2: i32, %arg3: memref<8x128xf32, #tpu.memory_space<vmem>>, %arg4: memref<128x128xf32, #tpu.memory_space<vmem>>, %arg5: memref<128x128xf32, #tpu.memory_space<vmem>>, %arg6: memref<1x128xf32, #tpu.memory_space<vmem>>, %arg7: memref<8x128xf32, #tpu.memory_space<vmem>>, %arg8: memref<8x128xf32, #tpu.memory_space<vmem>>) attributes {dimension_semantics = [#tpu.dimension_semantics<parallel>, #tpu.dimension_semantics<parallel>, #tpu.dimension_semantics<arbitrary>], iteration_bounds = array<i64: 1, 2, 1>, scalar_prefetch = 0 : i64, scratch_operands = 1 : i64, tpu.core_type = #tpu.core_type<tc>, window_params = [{transform_indices = @transform_0, window_bounds = array<i64: 8, 128>}, {transform_indices = @transform_1, window_bounds = array<i64: 128, 128>}, {transform_indices = @transform_2, window_bounds = array<i64: 128, 128>}, {transform_indices = @transform_3, window_bounds = array<i64: 1, 128>}, {transform_indices = @transform_4, window_bounds = array<i64: 8, 128>}]} {
    %c0_i32 = arith.constant 0 : i32
    %0 = arith.cmpi eq, %arg2, %c0_i32 : i32
    %1 = arith.extui %0 : i1 to i32
    %c0_i32_0 = arith.constant 0 : i32
    %2 = arith.cmpi ne, %1, %c0_i32_0 : i32
    scf.if %2 {
      %cst_13 = arith.constant 0.000000e+00 : f32
      %16 = vector.broadcast %cst_13 : f32 to vector<8x128xf32>
      %c0_14 = arith.constant 0 : index
      %c0_15 = arith.constant 0 : index
      %17 = vector.load %arg8[%c0_14, %c0_15] : memref<8x128xf32, #tpu.memory_space<vmem>>, vector<8x128xf32>
      tpu.vector_store %arg8[%c0_14, %c0_15], %16 {strides = array<i32>} : memref<8x128xf32, #tpu.memory_space<vmem>>, vector<8x128xf32>,
    } else {
    }
    %c0 = arith.constant 0 : index
    %c0_1 = arith.constant 0 : index
    %3 = vector.load %arg3[%c0, %c0_1] : memref<8x128xf32, #tpu.memory_space<vmem>>, vector<8x128xf32>
    %c0_2 = arith.constant 0 : index
    %c0_3 = arith.constant 0 : index
    %4 = vector.load %arg8[%c0_2, %c0_3] : memref<8x128xf32, #tpu.memory_space<vmem>>, vector<8x128xf32>
    %5 = arith.mulf %3, %3 : vector<8x128xf32>
    %c0_4 = arith.constant 0 : index
    %c0_5 = arith.constant 0 : index
    %6 = vector.load %arg4[%c0_4, %c0_5] : memref<128x128xf32, #tpu.memory_space<vmem>>, vector<128x128xf32>
    %cst = arith.constant dense<0.000000e+00> : vector<8x128xf32>
    %7 = tpu.matmul %5, %6, %cst {dimension_numbers = #tpu.dot_dimension_numbers<[1], [0], [0], [1], [0, 0, 1, 1], [], []>} : vector<8x128xf32>, vector<128x128xf32>, vector<8x128xf32> -> vector<8x128xf32>
    %c0_6 = arith.constant 0 : index
    %c0_7 = arith.constant 0 : index
    %8 = vector.load %arg5[%c0_6, %c0_7] : memref<128x128xf32, #tpu.memory_space<vmem>>, vector<128x128xf32>
    %cst_8 = arith.constant dense<0.000000e+00> : vector<8x128xf32>
    %9 = tpu.matmul %3, %8, %cst_8 {dimension_numbers = #tpu.dot_dimension_numbers<[1], [0], [0], [1], [0, 0, 1, 1], [], []>} : vector<8x128xf32>, vector<128x128xf32>, vector<8x128xf32> -> vector<8x128xf32>
    %10 = arith.addf %7, %9 : vector<8x128xf32>
    %11 = arith.addf %4, %10 : vector<8x128xf32>
    %c0_9 = arith.constant 0 : index
    %c0_10 = arith.constant 0 : index
    %12 = vector.load %arg8[%c0_9, %c0_10] : memref<8x128xf32, #tpu.memory_space<vmem>>, vector<8x128xf32>
    tpu.vector_store %arg8[%c0_9, %c0_10], %11 {strides = array<i32>} : memref<8x128xf32, #tpu.memory_space<vmem>>, vector<8x128xf32>,
    %c0_i32_11 = arith.constant 0 : i32
    %13 = arith.cmpi eq, %arg2, %c0_i32_11 : i32
    %14 = arith.extui %13 : i1 to i32
    %c0_i32_12 = arith.constant 0 : i32
    %15 = arith.cmpi ne, %14, %c0_i32_12 : i32
    scf.if %15 {
      %c0_13 = arith.constant 0 : index
      %c0_14 = arith.constant 0 : index
      %16 = vector.load %arg8[%c0_13, %c0_14] : memref<8x128xf32, #tpu.memory_space<vmem>>, vector<8x128xf32>
      %c0_15 = arith.constant 0 : index
      %c0_16 = arith.constant 0 : index
      %17 = vector.load %arg6[%c0_15, %c0_16] : memref<1x128xf32, #tpu.memory_space<vmem>>, vector<1x128xf32>
      %18 = vector.broadcast %17 : vector<1x128xf32> to vector<8x128xf32>
      %19 = arith.addf %16, %18 : vector<8x128xf32>
      %c0_17 = arith.constant 0 : index
      %c0_18 = arith.constant 0 : index
      %20 = vector.load %arg7[%c0_17, %c0_18] : memref<8x128xf32, #tpu.memory_space<vmem>>, vector<8x128xf32>
      tpu.vector_store %arg7[%c0_17, %c0_18], %19 {strides = array<i32>} : memref<8x128xf32, #tpu.memory_space<vmem>>, vector<8x128xf32>,
    } else {
    }
    return
  }
  func.func @transform_0(%arg0: i32, %arg1: i32, %arg2: i32) -> (i32, i32) {
    %c0_i32 = arith.constant 0 : i32
    return %arg1, %arg2 : i32, i32
  }
  func.func @transform_1(%arg0: i32, %arg1: i32, %arg2: i32) -> (i32, i32) {
    %c0_i32 = arith.constant 0 : i32
    return %arg2, %arg0 : i32, i32
  }
  func.func @transform_2(%arg0: i32, %arg1: i32, %arg2: i32) -> (i32, i32) {
    %c0_i32 = arith.constant 0 : i32
    return %arg2, %arg0 : i32, i32
  }
  func.func @transform_3(%arg0: i32, %arg1: i32, %arg2: i32) -> (i32, i32) {
    %c0_i32 = arith.constant 0 : i32
    %c0_i32_0 = arith.constant 0 : i32
    return %c0_i32, %arg0 : i32, i32
  }
  func.func @transform_4(%arg0: i32, %arg1: i32, %arg2: i32) -> (i32, i32) {
    %c0_i32 = arith.constant 0 : i32
    return %arg1, %arg0 : i32, i32
  }
}

</mosaic_0001>

<llo_original>
// kernel: custom_neuron_forward.1
$region0: #{custom_neuron_forward.1}
  #allocation0 [shape = 'u32[]', space=smem, size = 0x4, offset = 0x4, fixed_abs, tag = 'smem constant byte address 0x4 - core index']
  #allocation1 [shape = 'u32[72,128]{1,0:T(1,128)}', space=vmem, size = 0x9000, scoped, tag = 'internal scratch']
  #allocation2 [shape = 'f32[8,128]{1,0:T(8,128)}', space=vmem, size = 0x1000, scoped, tag = 'scratch operand']
  %s0 = inlined_call_operand.vmem [shape: f32[16,128], index: 0, kind: input, shape index: {}]
  %s1 = inlined_call_operand.hbm [shape: f32[128,128], index: 1, kind: input, shape index: {}]
  %s2 = inlined_call_operand.hbm [shape: f32[128,128], index: 2, kind: input, shape index: {}]
  %s3 = inlined_call_operand.vmem [shape: f32[1,128], index: 3, kind: input, shape index: {}]
  %s4 = inlined_call_operand.hbm [shape: f32[16,128], index: 4, kind: output, shape index: {}]
  %s5 = sld [smem:[#allocation0]]
  $region65: #{custom_neuron_forward.1} parent=0
    _
  %s7 = ssub.s32 1, %s5
  %s8 = scalar_select 0, %s7, %s5
  $region1: #{custom_neuron_forward.1} parent=0
    #allocation3 [shape = 'u8[65536]{0}', space=vmem, size = 0x10000, scoped, tag = 'input window, operand 1, single buffered']
    #allocation4 [shape = 's32[2]{0}', space=sflag, size = 0x8, scoped, tag = 'scoped memory for custom_neuron_forward.1']
    #allocation5 [shape = 's32[2]{0}', space=sflag, size = 0x8, scoped, tag = 'scoped memory for custom_neuron_forward.1']
    #allocation6 [shape = 'u8[65536]{0}', space=vmem, size = 0x10000, scoped, tag = 'input window, operand 2, single buffered']
    #allocation7 [shape = 's32[1]{0}', space=sflag, size = 0x4, scoped, tag = 'scoped memory for custom_neuron_forward.1']
    #allocation8 [shape = 'u8[8192]{0}', space=vmem, size = 0x2000, scoped, tag = 'output window, operand 0']
    %9 = vsyncpa [#allocation4], 0
    %10 = vsyncpa [#allocation7], 0
    %11 = vsyncpa [#allocation5], 0
    %s12 = scalar_lea.sflag [#allocation5], 1
    %13 = vsyncpa %s12, 0
    loop: start=0, step=1, limit=4
    $region2: #{custom_neuron_forward.1} parent=1 // loop_pre_header
      _
    $region3: #{custom_neuron_forward.1} parent=1 // loop_header
      %s15 = sphi 0, %s19
      %p16 = scmp.ge.s32.totalorder %s15, 4
      %s22 = sphi 0, %s41
      %s23 = sphi 0, %s37
      %s24 = sphi 0, %s33
      %s25 = sphi 0, %s22
      %s26 = sphi 0, %s23
      %s27 = sphi 0, %s24
      %s28 = sphi 0, %s25
      %s29 = sphi 0, %s26
      %s30 = sphi 0, %s27
      %s46 = sphi 0, %s48
      %s49 = sphi 0, %s46
      %s50 = sphi 0, %s49
      %s66 = sphi 0, %s50
      %s74 = sphi 0, %s76
      %s77 = sphi 0, %s74
      %s78 = sphi 0, %s77
      %s94 = sphi 0, %s78
      %s102 = sphi 0, %s104
      %s105 = sphi 0, %s102
      %s106 = sphi 0, %s105
      %s122 = sphi 0, %s106
      %s128 = sphi 0, %s130
      %s131 = sphi 0, %s128
      %s132 = sphi 0, %s131
      %s148 = sphi 0, %s132
      %s156 = sphi 0, %s158
      %s159 = sphi 0, %s156
      %s160 = sphi 0, %s159
      %s176 = sphi 0, %s160
    $region4: #{custom_neuron_forward.1} parent=1 // loop_header_branch
      %18 = sbr.rel (%p16) target = $region8
    $region5: #{custom_neuron_forward.1} parent=1 // loop_body
      %s20 = ssub.s32 %s15, 1
      %s21 = ssub.s32 %s15, 2
      %s31 = sadd.s32 1, %s24
      %p32 = scmp.ge.s32.totalorder %s31, 1
      %s33 = scalar_select %p32, 0, %s31
      %s34 = sadd.s32 1, %s23
      %s35 = scalar_select %p32, %s34, %s23
      %p36 = scmp.ge.s32.totalorder %s35, 2
      %s37 = scalar_select %p36, 0, %s35
      %s38 = sadd.s32 1, %s22
      %s39 = scalar_select %p36, %s38, %s22
      %p40 = scmp.ge.s32.totalorder %s39, 1
      %s41 = scalar_select %p40, 0, %s39
      %s42 = ssub.s32 %s23, %s37
      %s43 = ssub.s32 %s24, %s33
      %s44 = sor.u32 %s42, %s43
      %p45 = scmp.eq.s32.totalorder %s44, 0
      %s47 = sadd.s32 %s46, 1
      %s48 = scalar_select %p45, %s46, %s47
      %p51 = pneg %p45
      %p52 = scmp.eq.s32.totalorder %s15, 1
      %p53 = por %p51, %p52
      %p54 = scmp.ne.s32.totalorder %s46, %s49
      %p55 = scmp.eq.s32.totalorder %s15, 0
      %p56 = por %p54, %p55
      %p57 = scmp.ne.s32.totalorder %s46, %s49
      %p58 = scmp.eq.s32.totalorder %s20, 1
      %p59 = por %p57, %p58
      %p60 = scmp.ne.s32.totalorder %s49, %s50
      %p61 = scmp.eq.s32.totalorder %s20, 0
      %p62 = por %p60, %p61
      %p63 = scmp.ne.s32.totalorder %s49, %s50
      %p64 = scmp.eq.s32.totalorder %s21, 1
      %p65 = por %p63, %p64
      %p67 = scmp.ne.s32.totalorder %s50, %s66
      %p68 = scmp.eq.s32.totalorder %s21, 0
      %p69 = por %p67, %p68
      %s70 = ssub.s32 %s24, %s33
      %s71 = ssub.s32 %s22, %s41
      %s72 = sor.u32 %s70, %s71
      %p73 = scmp.eq.s32.totalorder %s72, 0
      %s75 = sadd.s32 %s74, 1
      %s76 = scalar_select %p73, %s74, %s75
      %p79 = pneg %p73
      %p80 = scmp.eq.s32.totalorder %s15, 1
      %p81 = por %p79, %p80
      %p82 = scmp.ne.s32.totalorder %s74, %s77
      %p83 = scmp.eq.s32.totalorder %s15, 0
      %p84 = por %p82, %p83
      %p85 = scmp.ne.s32.totalorder %s74, %s77
      %p86 = scmp.eq.s32.totalorder %s20, 1
      %p87 = por %p85, %p86
      %p88 = scmp.ne.s32.totalorder %s77, %s78
      %p89 = scmp.eq.s32.totalorder %s20, 0
      %p90 = por %p88, %p89
      %p91 = scmp.ne.s32.totalorder %s77, %s78
      %p92 = scmp.eq.s32.totalorder %s21, 1
      %p93 = por %p91, %p92
      %p95 = scmp.ne.s32.totalorder %s78, %s94
      %p96 = scmp.eq.s32.totalorder %s21, 0
      %p97 = por %p95, %p96
      %s98 = ssub.s32 %s24, %s33
      %s99 = ssub.s32 %s22, %s41
      %s100 = sor.u32 %s98, %s99
      %p101 = scmp.eq.s32.totalorder %s100, 0
      %s103 = sadd.s32 %s102, 1
      %s104 = scalar_select %p101, %s102, %s103
      %p107 = pneg %p101
      %p108 = scmp.eq.s32.totalorder %s15, 1
      %p109 = por %p107, %p108
      %p110 = scmp.ne.s32.totalorder %s102, %s105
      %p111 = scmp.eq.s32.totalorder %s15, 0
      %p112 = por %p110, %p111
      %p113 = scmp.ne.s32.totalorder %s102, %s105
      %p114 = scmp.eq.s32.totalorder %s20, 1
      %p115 = por %p113, %p114
      %p116 = scmp.ne.s32.totalorder %s105, %s106
      %p117 = scmp.eq.s32.totalorder %s20, 0
      %p118 = por %p116, %p117
      %p119 = scmp.ne.s32.totalorder %s105, %s106
      %p120 = scmp.eq.s32.totalorder %s21, 1
      %p121 = por %p119, %p120
      %p123 = scmp.ne.s32.totalorder %s106, %s122
      %p124 = scmp.eq.s32.totalorder %s21, 0
      %p125 = por %p123, %p124
      %s126 = ssub.s32 %s22, %s41
      %p127 = scmp.eq.s32.totalorder %s126, 0
      %s129 = sadd.s32 %s128, 1
      %s130 = scalar_select %p127, %s128, %s129
      %p133 = pneg %p127
      %p134 = scmp.eq.s32.totalorder %s15, 1
      %p135 = por %p133, %p134
      %p136 = scmp.ne.s32.totalorder %s128, %s131
      %p137 = scmp.eq.s32.totalorder %s15, 0
      %p138 = por %p136, %p137
      %p139 = scmp.ne.s32.totalorder %s128, %s131
      %p140 = scmp.eq.s32.totalorder %s20, 1
      %p141 = por %p139, %p140
      %p142 = scmp.ne.s32.totalorder %s131, %s132
      %p143 = scmp.eq.s32.totalorder %s20, 0
      %p144 = por %p142, %p143
      %p145 = scmp.ne.s32.totalorder %s131, %s132
      %p146 = scmp.eq.s32.totalorder %s21, 1
      %p147 = por %p145, %p146
      %p149 = scmp.ne.s32.totalorder %s132, %s148
      %p150 = scmp.eq.s32.totalorder %s21, 0
      %p151 = por %p149, %p150
      %s152 = ssub.s32 %s23, %s37
      %s153 = ssub.s32 %s22, %s41
      %s154 = sor.u32 %s152, %s153
      %p155 = scmp.eq.s32.totalorder %s154, 0
      %s157 = sadd.s32 %s156, 1
      %s158 = scalar_select %p155, %s156, %s157
      %p161 = pneg %p155
      %p162 = scmp.eq.s32.totalorder %s15, 1
      %p163 = por %p161, %p162
      %p164 = scmp.ne.s32.totalorder %s156, %s159
      %p165 = scmp.eq.s32.totalorder %s15, 0
      %p166 = por %p164, %p165
      %p167 = scmp.ne.s32.totalorder %s156, %s159
      %p168 = scmp.eq.s32.totalorder %s20, 1
      %p169 = por %p167, %p168
      %p170 = scmp.ne.s32.totalorder %s159, %s160
      %p171 = scmp.eq.s32.totalorder %s20, 0
      %p172 = por %p170, %p171
      %p173 = scmp.ne.s32.totalorder %s159, %s160
      %p174 = scmp.eq.s32.totalorder %s21, 1
      %p175 = por %p173, %p174
      %p177 = scmp.ne.s32.totalorder %s160, %s176
      %p178 = scmp.eq.s32.totalorder %s21, 0
      %p179 = por %p177, %p178
      %p180 = scmp.le.s32.totalorder 1, %s15
      %p181 = scmp.lt.s32.totalorder %s15, 3
      %p182 = pnand %p180, %p181
      %p183 = pneg %p182
      // Predicated region
      $region9: #{custom_neuron_forward.1} parent=5 // pred_check
        _
      $region10: #{custom_neuron_forward.1} parent=5 // pred_check_branch
        %185 = sbr.rel (%p182) target = $region12
      $region11: #{custom_neuron_forward.1} parent=5 // pred_region
        %s186 = ssub.s32 %s15, 1
        // Predicated region
        $region13: #{custom_neuron_forward.1} parent=11 // pred_check
          %p187 = pneg %p90
        $region14: #{custom_neuron_forward.1} parent=11 // pred_check_branch
          %189 = sbr.rel (%p187) target = $region16
        $region15: #{custom_neuron_forward.1} parent=11 // pred_region
          %s190 = smul.u32 16, %s27
          %192 = vsyncadd [#allocation4], 0
          %s193 = sadd.s32 %s25, %s190
          %s194 = smul.addr %s193, 8
          %s195 = scalar_lea.hbm %s1, %s194
          %s196 = sshll.u32 %s195, 4
          %s197 = int_to_ptr.hbm [resolvable:$true] %s196
          %s198 = sshll.u32 [#allocation3], 4
          %s199 = int_to_ptr.vmem [resolvable:$true] %s198
          %204 = dma.hbm_to_vmem [thread:$0]  %s197, 2048, %s199, [#allocation4], 128, 128, 8
        $region16: #{custom_neuron_forward.1} parent=11 // pred_fallthru
          _
        // Predicated region
        $region17: #{custom_neuron_forward.1} parent=11 // pred_check
          %p205 = pneg %p118
        $region18: #{custom_neuron_forward.1} parent=11 // pred_check_branch
          %207 = sbr.rel (%p205) target = $region20
        $region19: #{custom_neuron_forward.1} parent=11 // pred_region
          %s208 = smul.u32 16, %s27
          %210 = vsyncadd [#allocation7], 0
          %s211 = sadd.s32 %s25, %s208
          %s212 = smul.addr %s211, 8
          %s213 = scalar_lea.hbm %s2, %s212
          %s214 = sshll.u32 %s213, 4
          %s215 = int_to_ptr.hbm [resolvable:$true] %s214
          %s216 = sshll.u32 [#allocation6], 4
          %s217 = int_to_ptr.vmem [resolvable:$true] %s216
          %222 = dma.hbm_to_vmem [thread:$0]  %s215, 2048, %s217, [#allocation7], 128, 128, 8
        $region20: #{custom_neuron_forward.1} parent=11 // pred_fallthru
          _
        // Predicated region
        $region21: #{custom_neuron_forward.1} parent=11 // pred_check
          %p223 = pneg %p144
        $region22: #{custom_neuron_forward.1} parent=11 // pred_check_branch
          %225 = sbr.rel (%p223) target = $region24
        $region23: #{custom_neuron_forward.1} parent=11 // pred_region
          %p226 = scmp.lt.s32.totalorder %s25, 0
          %s227 = scalar_select %p226, %s25, 0
          %s228 = scalar_lea.vmem %s3, %s227
        $region24: #{custom_neuron_forward.1} parent=11 // pred_fallthru
          _
      $region12: #{custom_neuron_forward.1} parent=5 // pred_fallthru
        _
      %p229 = scmp.lt.s32.totalorder %s15, 2
      // Predicated region
      $region25: #{custom_neuron_forward.1} parent=5 // pred_check
        %p230 = pneg %p229
      $region26: #{custom_neuron_forward.1} parent=5 // pred_check_branch
        %232 = sbr.rel (%p230) target = $region28
      $region27: #{custom_neuron_forward.1} parent=5 // pred_region
        // Predicated region
        $region29: #{custom_neuron_forward.1} parent=27 // pred_check
          %p233 = pneg %p56
        $region30: #{custom_neuron_forward.1} parent=27 // pred_check_branch
          %235 = sbr.rel (%p233) target = $region32
        $region31: #{custom_neuron_forward.1} parent=27 // pred_region
          %p236 = scmp.lt.s32.totalorder %s23, 1
          %s237 = scalar_select %p236, %s23, 1
          %p238 = scmp.lt.s32.totalorder %s24, 0
          %s239 = scalar_select %p238, %s24, 0
          %s240 = sadd.s32 %s239, %s237
          %s241 = smul.addr %s240, 8
          %s242 = scalar_lea.vmem %s0, %s241
        $region32: #{custom_neuron_forward.1} parent=27 // pred_fallthru
          _
      $region28: #{custom_neuron_forward.1} parent=5 // pred_fallthru
        _
      %p243 = scmp.le.s32.totalorder 1, %s15
      %p244 = scmp.lt.s32.totalorder %s15, 3
      %p245 = pnand %p243, %p244
      %p246 = pneg %p245
      // Predicated region
      $region33: #{custom_neuron_forward.1} parent=5 // pred_check
        _
      $region34: #{custom_neuron_forward.1} parent=5 // pred_check_branch
        %248 = sbr.rel (%p245) target = $region36
      $region35: #{custom_neuron_forward.1} parent=5 // pred_region
        %s249 = ssub.s32 %s15, 1
        // Predicated region
        $region37: #{custom_neuron_forward.1} parent=35 // pred_check
          %p250 = pneg %p90
        $region38: #{custom_neuron_forward.1} parent=35 // pred_check_branch
          %252 = sbr.rel (%p250) target = $region40
        $region39: #{custom_neuron_forward.1} parent=35 // pred_region
          %254 = dma.done [#allocation4], 2048
        $region40: #{custom_neuron_forward.1} parent=35 // pred_fallthru
          _
        // Predicated region
        $region41: #{custom_neuron_forward.1} parent=35 // pred_check
          %p255 = pneg %p118
        $region42: #{custom_neuron_forward.1} parent=35 // pred_check_branch
          %257 = sbr.rel (%p255) target = $region44
        $region43: #{custom_neuron_forward.1} parent=35 // pred_region
          %259 = dma.done [#allocation7], 2048
        $region44: #{custom_neuron_forward.1} parent=35 // pred_fallthru
          _
        %p260 = scmp.lt.s32.totalorder %s26, 1
        %s261 = scalar_select %p260, %s26, 1
        %p262 = scmp.lt.s32.totalorder %s27, 0
        %s263 = scalar_select %p262, %s27, 0
        %s264 = sadd.s32 %s263, %s261
        %s265 = smul.addr %s264, 8
        %s266 = scalar_lea.vmem %s0, %s265
        %p267 = pneg %p62
        %p268 = pneg %p59
        %p269 = pneg %p90
        %p270 = pneg %p87
        %p271 = pneg %p118
        %p272 = pneg %p115
        %p273 = scmp.lt.s32.totalorder %s25, 0
        %s274 = scalar_select %p273, %s25, 0
        %s275 = scalar_lea.vmem %s3, %s274
        %p276 = pneg %p144
        %p277 = pneg %p141
        %p278 = pneg %p172
        %p279 = pneg %p169
        %s280 = sand.u32 %s159, 1
        %s281 = scalar_lea.sflag [#allocation5], %s280
        %s282 = sand.u32 %s159, 1
        %s283 = smul.addr %s282, 8
        %s284 = scalar_lea.vmem [#allocation8], %s283
        %p285 = scmp.lt.s32.totalorder %s26, 1
        %s286 = scalar_select %p285, %s26, 1
        %p287 = scmp.lt.s32.totalorder %s27, 0
        %s288 = scalar_select %p287, %s27, 0
        %s289 = sadd.s32 %s288, %s286
        %s290 = smul.addr %s289, 8
        %s291 = scalar_lea.vmem %s0, %s290
        %s292 = smul.u32 16, %s27
        %s293 = smul.u32 16, %s27
        %p294 = scmp.lt.s32.totalorder %s25, 0
        %s295 = scalar_select %p294, %s25, 0
        %s296 = scalar_lea.vmem %s3, %s295
        %p297 = scmp.eq.s32.totalorder %s27, 0
        // Predicated region
        $region45: #{custom_neuron_forward.1} parent=35 // pred_check
          %p298 = pneg %p297
        $region46: #{custom_neuron_forward.1} parent=35 // pred_check_branch
          %300 = sbr.rel (%p298) target = $region48
        $region47: #{custom_neuron_forward.1} parent=35 // pred_region
          %301 = vst [vmem:[#allocation2] sm:$0xff] 0.0
        $region48: #{custom_neuron_forward.1} parent=35 // pred_fallthru
          _
        %v302 = vld [vmem:[%s291] sm:$0xff]
        %v303 = vld [vmem:[#allocation2] sm:$0xff]
        %v304 = vmul.f32 %v302, %v302
        %v305 = vld [vmem:[#allocation3] sm:$0xff]
        %v306 = vld [vmem:[#allocation3 + $0x8] sm:$0xff]
        %v307 = vld [vmem:[#allocation3 + $0x10] sm:$0xff]
        %v308 = vld [vmem:[#allocation3 + $0x18] sm:$0xff]
        %v309 = vld [vmem:[#allocation3 + $0x20] sm:$0xff]
        %v310 = vld [vmem:[#allocation3 + $0x28] sm:$0xff]
        %v311 = vld [vmem:[#allocation3 + $0x30] sm:$0xff]
        %v312 = vld [vmem:[#allocation3 + $0x38] sm:$0xff]
        %v313 = vld [vmem:[#allocation3 + $0x40] sm:$0xff]
        %v314 = vld [vmem:[#allocation3 + $0x48] sm:$0xff]
        %v315 = vld [vmem:[#allocation3 + $0x50] sm:$0xff]
        %v316 = vld [vmem:[#allocation3 + $0x58] sm:$0xff]
        %v317 = vld [vmem:[#allocation3 + $0x60] sm:$0xff]
        %v318 = vld [vmem:[#allocation3 + $0x68] sm:$0xff]
        %v319 = vld [vmem:[#allocation3 + $0x70] sm:$0xff]
        %v320 = vld [vmem:[#allocation3 + $0x78] sm:$0xff]
        %v321 = vld [vmem:[#allocation6] sm:$0xff]
        %v322 = vld [vmem:[#allocation6 + $0x8] sm:$0xff]
        %v323 = vld [vmem:[#allocation6 + $0x10] sm:$0xff]
        %v324 = vld [vmem:[#allocation6 + $0x18] sm:$0xff]
        %v325 = vld [vmem:[#allocation6 + $0x20] sm:$0xff]
        %v326 = vld [vmem:[#allocation6 + $0x28] sm:$0xff]
        %v327 = vld [vmem:[#allocation6 + $0x30] sm:$0xff]
        %v328 = vld [vmem:[#allocation6 + $0x38] sm:$0xff]
        %v329 = vld [vmem:[#allocation6 + $0x40] sm:$0xff]
        %v330 = vld [vmem:[#allocation6 + $0x48] sm:$0xff]
        %v331 = vld [vmem:[#allocation6 + $0x50] sm:$0xff]
        %v332 = vld [vmem:[#allocation6 + $0x58] sm:$0xff]
        %v333 = vld [vmem:[#allocation6 + $0x60] sm:$0xff]
        %v334 = vld [vmem:[#allocation6 + $0x68] sm:$0xff]
        %v335 = vld [vmem:[#allocation6 + $0x70] sm:$0xff]
        %v336 = vld [vmem:[#allocation6 + $0x78] sm:$0xff]
        %337 = vmatpush.msra.mxu0 %v336
        %338 = vmatpush.msra.mxu0 %v335
        %339 = vmatpush.msra.mxu0 %v334
        %340 = vmatpush.msra.mxu0 %v333
        %341 = vmatpush.msra.mxu0 %v332
        %342 = vmatpush.msra.mxu0 %v331
        %343 = vmatpush.msra.mxu0 %v330
        %344 = vmatpush.msra.mxu0 %v329
        %345 = vmatpush.msra.mxu0 %v328
        %346 = vmatpush.msra.mxu0 %v327
        %347 = vmatpush.msra.mxu0 %v326
        %348 = vmatpush.msra.mxu0 %v325
        %349 = vmatpush.msra.mxu0 %v324
        %350 = vmatpush.msra.mxu0 %v323
        %351 = vmatpush.msra.mxu0 %v322
        %352 = vmatpush.msra.mxu0 %v321
        %353 = vmatmul.f32.gmra.mxu0 %v302
        %v354 = vpop.f32.mrf.mxu0
        %v355 = vadd.f32 0.0, %v354
        %356 = vdwg.mxu0
        %357 = vmatpush.msra.mxu0 %v320
        %358 = vmatpush.msra.mxu0 %v319
        %359 = vmatpush.msra.mxu0 %v318
        %360 = vmatpush.msra.mxu0 %v317
        %361 = vmatpush.msra.mxu0 %v316
        %362 = vmatpush.msra.mxu0 %v315
        %363 = vmatpush.msra.mxu0 %v314
        %364 = vmatpush.msra.mxu0 %v313
        %365 = vmatpush.msra.mxu0 %v312
        %366 = vmatpush.msra.mxu0 %v311
        %367 = vmatpush.msra.mxu0 %v310
        %368 = vmatpush.msra.mxu0 %v309
        %369 = vmatpush.msra.mxu0 %v308
        %370 = vmatpush.msra.mxu0 %v307
        %371 = vmatpush.msra.mxu0 %v306
        %372 = vmatpush.msra.mxu0 %v305
        %373 = vmatmul.f32.gmra.mxu0 %v304
        %v374 = vpop.f32.mrf.mxu0
        %v375 = vadd.f32 %v355, %v374
        %376 = vdwg.mxu0
        %v377 = vadd.f32 %v303, %v375
        %378 = vst [vmem:[#allocation2] sm:$0xff] %v377
        // Predicated region
        $region49: #{custom_neuron_forward.1} parent=35 // pred_check
          %p379 = pneg %p297
        $region50: #{custom_neuron_forward.1} parent=35 // pred_check_branch
          %381 = sbr.rel (%p379) target = $region52
        $region51: #{custom_neuron_forward.1} parent=35 // pred_region
          %v382 = vld [vmem:[#allocation2] sm:$0xff]
          %v383 = vld [vmem:[%s296] sm:$0x1]
          %v385 = vperm.slane %v383, 0
          %v387 = vadd.f32 %v382, %v385
          %388 = vst [vmem:[%s284] sm:$0xff] %v387
        $region52: #{custom_neuron_forward.1} parent=35 // pred_fallthru
          _
        %s389 = sand.u32 %s159, 1
        %s390 = scalar_lea.sflag [#allocation5], %s389
        %s391 = sand.u32 %s159, 1
        %s392 = smul.addr %s391, 8
        %s393 = scalar_lea.vmem [#allocation8], %s392
        // Predicated region
        $region53: #{custom_neuron_forward.1} parent=35 // pred_check
          %p394 = pneg %p169
        $region54: #{custom_neuron_forward.1} parent=35 // pred_check_branch
          %396 = sbr.rel (%p394) target = $region56
        $region55: #{custom_neuron_forward.1} parent=35 // pred_region
          %398 = vsyncadd %s390, 0
          %s399 = sadd.s32 %s25, %s26
          %s400 = smul.addr %s399, 8
          %s401 = scalar_lea.hbm %s4, %s400
          %s403 = sshll.u32 %s393, 4
          %s404 = int_to_ptr.vmem [resolvable:$true] %s403
          %s405 = sshll.u32 %s401, 4
          %s406 = int_to_ptr.hbm [resolvable:$true] %s405
          %408 = dma.vmem_to_hbm [thread:$0]  %s404, 128, %s406, %s390
        $region56: #{custom_neuron_forward.1} parent=35 // pred_fallthru
          _
      $region36: #{custom_neuron_forward.1} parent=5 // pred_fallthru
        _
      %p409 = scmp.le.s32.totalorder 2, %s15
      // Predicated region
      $region57: #{custom_neuron_forward.1} parent=5 // pred_check
        %p410 = pneg %p409
      $region58: #{custom_neuron_forward.1} parent=5 // pred_check_branch
        %412 = sbr.rel (%p410) target = $region60
      $region59: #{custom_neuron_forward.1} parent=5 // pred_region
        %s413 = ssub.s32 %s15, 2
        // Predicated region
        $region61: #{custom_neuron_forward.1} parent=59 // pred_check
          %p414 = pneg %p175
        $region62: #{custom_neuron_forward.1} parent=59 // pred_check_branch
          %416 = sbr.rel (%p414) target = $region64
        $region63: #{custom_neuron_forward.1} parent=59 // pred_region
          %s417 = sand.u32 %s160, 1
          %s418 = scalar_lea.sflag [#allocation5], %s417
          %s419 = sand.u32 %s160, 1
          %s420 = smul.addr %s419, 8
          %s421 = scalar_lea.vmem [#allocation8], %s420
          %423 = dma.done %s418, 128
        $region64: #{custom_neuron_forward.1} parent=59 // pred_fallthru
          _
      $region60: #{custom_neuron_forward.1} parent=5 // pred_fallthru
        _
    $region6: #{custom_neuron_forward.1} parent=1 // loop_footer
      %s19 = sadd.s32 1, %s15
    $region7: #{custom_neuron_forward.1} parent=1 // loop_footer_branch
      %14 = sbr.rel target = $region3
    $region8: #{custom_neuron_forward.1} parent=1 // loop_exit
      _
    %424 = vsyncpa [#allocation4], 1
    %s425 = scalar_lea.sflag [#allocation4], 1
    %426 = vsyncpa %s425, 1
    %427 = vsyncpa [#allocation7], 1
    %428 = vsyncpa [#allocation5], 1
    %s429 = scalar_lea.sflag [#allocation5], 1
    %430 = vsyncpa %s429, 1

</llo_original>
